<compile_context>
chip_gen: v7x
topology: tpu7x:2x2x1
jax: 0.10.0
libtpu: 0.0.40
codegen_flags: <defaults>
</compile_context>

<pallas_src>
import math
import functools

import jax
import jax.numpy as jnp
from jax.experimental import pallas as pl
from jax.experimental.pallas import tpu as pltpu

_MIB = 1024 * 1024


def _round_up(x, m):
    return ((x + m - 1) // m) * m


def _vmem_capacity_bytes():
    """Best-effort per-core VMEM capacity query; conservative (v7x) fallback."""
    try:
        info = pltpu.get_tpu_info()
        for name in ("vmem_capacity_bytes", "vmem_size_bytes", "vmem_bytes"):
            cap = getattr(info, name, None)
            if cap:
                return int(cap)
    except Exception:
        pass
    return 64 * _MIB


def _choose_tile(B, S, D, emb_dtype, vmem_cap):
    """Pick rows-per-grid-step (TB) and the vmem limit from a VMEM budget."""
    itemsize = jnp.dtype(emb_dtype).itemsize
    sublane = 8 * max(1, 4 // itemsize)            # 8 (f32) / 16 (bf16)
    lane_d = _round_up(D, 128)
    # Per-row VMEM bytes of one set of blocks, including tile padding.
    row_bytes = (_round_up(S, sublane) * lane_d * itemsize    # sequence block
                 + sublane * lane_d * itemsize                # item block
                 + 8 * 128 * 4)                               # f32 out block
    # Generation-aware budgets: v7x has 64 MiB/TC, v5e/v6e have 128 MiB.
    if vmem_cap <= 64 * _MIB:
        block_budget, vmem_limit = 12 * _MIB, 48 * _MIB
    else:
        block_budget, vmem_limit = 24 * _MIB, 64 * _MIB
    tb = block_budget // (2 * row_bytes)           # 2x: double-buffered blocks
    # Keep >= ~4 grid steps so the "parallel" batch axis can shard across the
    # two v7x TensorCores and DMA/compute overlap is preserved.
    tb = min(tb, _round_up(pl.cdiv(B, 4), 8))
    tb = max(8, (tb // 8) * 8)
    tb = min(tb, B)
    return int(tb), int(vmem_limit)


def _recommend_kernel(item_ref, seq_ref, w_ref, b_ref, out_ref, *, is_train):
    """Processes TB batch rows per grid step.

    item_ref: (TB, 1, D)   seq_ref: (TB, S, D)   (any float dtype; f32 math)
    w_ref:    (2, D)       b_ref:   (1, 2)
    out_ref:  (TB, 1, 2)
    """
    item = item_ref[...].astype(jnp.float32)             # (TB, 1, D)
    seq = seq_ref[...].astype(jnp.float32)               # (TB, S, D)
    d = item.shape[-1]
    inv_sqrt_d = 1.0 / math.sqrt(d)

    # ---- attention1: scaled dot-product attention over the sequence ----
    # Batched VPU multiply + reduce (no M=1 MXU matmuls).  keepdims=True keeps
    # everything in the (TB, S|1, D|1) layout so no relayouts are needed.
    # The axis=-1 sum accumulates per-lane over D/128 vreg tiles with one
    # final cross-lane reduce.
    scores = jnp.sum(item * seq, axis=-1, keepdims=True) * inv_sqrt_d  # (TB,S,1)
    m = jnp.max(scores, axis=1, keepdims=True)                         # (TB,1,1)
    e = jnp.exp(scores - m)                                            # (TB,S,1)
    denom = jnp.sum(e, axis=1, keepdims=True)                          # (TB,1,1)
    attn = e * pl.reciprocal(denom)                                    # (TB,S,1)

    x = jnp.sum(attn * seq, axis=1, keepdims=True)                     # (TB,1,D)

    # ---- linear head (2 classes): two lane reductions instead of N=2 MXU ----
    w = w_ref[...].astype(jnp.float32)                                 # (2, D)
    l0 = jnp.sum(x * w[0:1, :], axis=-1, keepdims=True)                # (TB,1,1)
    l1 = jnp.sum(x * w[1:2, :], axis=-1, keepdims=True)                # (TB,1,1)
    logits = jnp.concatenate([l0, l1], axis=-1)                        # (TB,1,2)
    logits = logits + b_ref[...].astype(jnp.float32)                   # (TB,1,2)

    # ---- (log_)softmax over the class dim ----
    lm = jnp.max(logits, axis=-1, keepdims=True)
    z = logits - lm
    lse = jnp.log(jnp.sum(jnp.exp(z), axis=-1, keepdims=True))
    res = (z - lse) if is_train else jnp.exp(z - lse)
    out_ref[...] = res.astype(out_ref.dtype)


def recommendation_forward(item_emb, sequence_emb, weight, bias, if_train):
    """item_emb: (B, 1, D), sequence_emb: (B, S, D), weight: (2, D), bias: (2,)

    Embeddings may be float32 or bfloat16 (bf16 recommended: halves HBM
    traffic on this bandwidth-bound kernel); math is float32 in-kernel.
    `if_train` must be a Python bool (it selects the compiled kernel variant).
    """
    B, one, D = item_emb.shape
    assert one == 1
    S = sequence_emb.shape[1]

    tb, vmem_limit = _choose_tile(B, S, D, sequence_emb.dtype,
                                  _vmem_capacity_bytes())
    grid = pl.cdiv(B, tb)   # ragged last block: reads past-end rows, stores
                            # to those rows are masked by the pipeline.

    bias2d = bias.reshape(1, 2)
    kern = functools.partial(_recommend_kernel, is_train=bool(if_train))

    out = pl.pallas_call(
        kern,
        out_shape=jax.ShapeDtypeStruct((B, 1, 2), jnp.float32),
        grid_spec=pltpu.PrefetchScalarGridSpec(
            num_scalar_prefetch=0,
            grid=(grid,),
            in_specs=[
                pl.BlockSpec((tb, 1, D), lambda i: (i, 0, 0)),   # item_emb
                pl.BlockSpec((tb, S, D), lambda i: (i, 0, 0)),   # sequence_emb
                pl.BlockSpec((2, D), lambda i: (0, 0)),          # weight (resident)
                pl.BlockSpec((1, 2), lambda i: (0, 0)),          # bias   (resident)
            ],
            out_specs=pl.BlockSpec((tb, 1, 2), lambda i: (i, 0, 0)),
        ),
        compiler_params=pltpu.CompilerParams(
            dimension_semantics=("parallel",),
            vmem_limit_bytes=vmem_limit),
    )(item_emb, sequence_emb, weight, bias2d)
    return out.reshape(B, 2)


def _reference_forward(item_emb, sequence_emb, weight, bias, if_train):
    hi = jax.lax.Precision.HIGHEST
    d = item_emb.shape[-1]
    scores = jnp.einsum("bqd,bsd->bqs", item_emb, sequence_emb,
                        precision=hi) / jnp.sqrt(jnp.float32(d))
    attn = jax.nn.softmax(scores, axis=-1)
    x = jnp.einsum("bqs,bsd->bqd", attn, sequence_emb, precision=hi)
    logits = jnp.einsum("bqd,cd->bqc", x, weight, precision=hi) + bias
    logits = logits.reshape(logits.shape[0], logits.shape[2])
    if if_train:
        return jax.nn.log_softmax(logits, axis=-1)
    return jax.nn.softmax(logits, axis=-1)


def _make_inputs(key, B, S, D):
    k_item, k_seq, k_w, k_b = jax.random.split(key, 4)
    item = jax.random.normal(k_item, (B, 1, D), dtype=jnp.float32)
    seq = jax.random.normal(k_seq, (B, S, D), dtype=jnp.float32)
    # deterministic parameter init mirroring the PyTorch __init__
    stdv = 1.0 / math.sqrt(D)
    w = jax.random.uniform(k_w, (2, D), minval=-stdv, maxval=stdv,
                           dtype=jnp.float32)
    b = jax.random.uniform(k_b, (2,), minval=-stdv, maxval=stdv,
                           dtype=jnp.float32)
    return item, seq, w, b


if __name__ == "__main__":
    key = jax.random.PRNGKey(0)
    k1, k2, k3 = jax.random.split(key, 3)

    # --- small f32 config (single grid step) ---
    item, seq, w, b = _make_inputs(k1, B=2, S=8, D=32)
    out_train = recommendation_forward(item, seq, w, b, True)   # log_softmax
    out_eval = recommendation_forward(item, seq, w, b, False)   # softmax
    jax.block_until_ready((out_train, out_eval))
    ref_train = _reference_forward(item, seq, w, b, True)
    ref_eval = _reference_forward(item, seq, w, b, False)
    assert jnp.allclose(out_train, ref_train, rtol=1e-4, atol=1e-5)
    assert jnp.allclose(out_eval, ref_eval, rtol=1e-4, atol=1e-5)

    # --- multi-grid-step f32 config (resident weights across steps,
    #     D not a multiple of 128, S not of 8; no host-side padding) ---
    item, seq, w, b = _make_inputs(k2, B=48, S=10, D=100)
    out2 = recommendation_forward(item, seq, w, b, True)
    jax.block_until_ready(out2)
    ref2 = _reference_forward(item, seq, w, b, True)
    assert jnp.allclose(out2, ref2, rtol=1e-4, atol=1e-5)

    # --- bf16 embeddings + ragged last block (B=40 with TB=16 -> grid of 3,
    #     last block covers only 8 valid rows; masked stores, no padding) ---
    item, seq, w, b = _make_inputs(k3, B=40, S=12, D=128)
    item_bf = item.astype(jnp.bfloat16)
    seq_bf = seq.astype(jnp.bfloat16)
    out3 = recommendation_forward(item_bf, seq_bf, w, b, False)
    jax.block_until_ready(out3)
    ref3 = _reference_forward(item_bf.astype(jnp.float32),
                              seq_bf.astype(jnp.float32), w, b, False)
    assert jnp.allclose(out3, ref3, rtol=1e-3, atol=1e-5)

    print("KERNEL_OK")
</pallas_src>

<mosaic_0001>
module attributes {stable_mosaic.version = 11 : i64} {
  func.func @_recommend_kernel(%arg0: i32, %arg1: memref<2x1x32xf32, #tpu.memory_space<vmem>>, %arg2: memref<2x8x32xf32, #tpu.memory_space<vmem>>, %arg3: memref<2x32xf32, #tpu.memory_space<vmem>>, %arg4: memref<1x2xf32, #tpu.memory_space<vmem>>, %arg5: memref<2x1x2xf32, #tpu.memory_space<vmem>>) attributes {dimension_semantics = [#tpu.dimension_semantics<parallel>], iteration_bounds = array<i64: 1>, scalar_prefetch = 0 : i64, scratch_operands = 0 : i64, tpu.core_type = #tpu.core_type<tc>, window_params = [{transform_indices = @transform_0, window_bounds = array<i64: 2, 1, 32>}, {transform_indices = @transform_1, window_bounds = array<i64: 2, 8, 32>}, {pipeline_mode = #tpu.pipeline_mode<synchronous>, transform_indices = @transform_2, window_bounds = array<i64: 2, 32>}, {pipeline_mode = #tpu.pipeline_mode<synchronous>, transform_indices = @transform_3, window_bounds = array<i64: 1, 2>}, {transform_indices = @transform_4, window_bounds = array<i64: 2, 1, 2>}]} {
    %c0 = arith.constant 0 : index
    %c0_0 = arith.constant 0 : index
    %c0_1 = arith.constant 0 : index
    %0 = vector.load %arg1[%c0, %c0_0, %c0_1] : memref<2x1x32xf32, #tpu.memory_space<vmem>>, vector<2x1x32xf32>
    %c0_2 = arith.constant 0 : index
    %c0_3 = arith.constant 0 : index
    %c0_4 = arith.constant 0 : index
    %1 = vector.load %arg2[%c0_2, %c0_3, %c0_4] : memref<2x8x32xf32, #tpu.memory_space<vmem>>, vector<2x8x32xf32>
    %2 = vector.broadcast %0 : vector<2x1x32xf32> to vector<2x8x32xf32>
    %3 = arith.mulf %2, %1 : vector<2x8x32xf32>
    %cst = arith.constant dense<0.000000e+00> : vector<2x8xf32>
    %4 = vector.multi_reduction <add>, %3, %cst [2] : vector<2x8x32xf32> to vector<2x8xf32>
    %5 = vector.shape_cast %4 : vector<2x8xf32> to vector<2x8x1xf32>
    %cst_5 = arith.constant 0.176776692 : f32
    %6 = vector.broadcast %cst_5 : f32 to vector<2x8x1xf32>
    %7 = arith.mulf %5, %6 : vector<2x8x1xf32>
    %cst_6 = arith.constant dense<0xFF800000> : vector<2x1xf32>
    %8 = vector.multi_reduction <maximumf>, %7, %cst_6 [1] : vector<2x8x1xf32> to vector<2x1xf32>
    %9 = vector.shape_cast %8 : vector<2x1xf32> to vector<2x1x1xf32>
    %10 = vector.broadcast %9 : vector<2x1x1xf32> to vector<2x8x1xf32>
    %11 = arith.subf %7, %10 : vector<2x8x1xf32>
    %12 = math.exp %11 : vector<2x8x1xf32>
    %cst_7 = arith.constant dense<0.000000e+00> : vector<2x1xf32>
    %13 = vector.multi_reduction <add>, %12, %cst_7 [1] : vector<2x8x1xf32> to vector<2x1xf32>
    %14 = vector.shape_cast %13 : vector<2x1xf32> to vector<2x1x1xf32>
    %15 = tpu.reciprocal %14 : vector<2x1x1xf32> -> vector<2x1x1xf32>
    %16 = vector.broadcast %15 : vector<2x1x1xf32> to vector<2x8x1xf32>
    %17 = arith.mulf %12, %16 : vector<2x8x1xf32>
    %18 = vector.broadcast %17 : vector<2x8x1xf32> to vector<2x8x32xf32>
    %19 = arith.mulf %18, %1 : vector<2x8x32xf32>
    %cst_8 = arith.constant dense<0.000000e+00> : vector<2x32xf32>
    %20 = vector.multi_reduction <add>, %19, %cst_8 [1] : vector<2x8x32xf32> to vector<2x32xf32>
    %21 = vector.shape_cast %20 : vector<2x32xf32> to vector<2x1x32xf32>
    %c0_9 = arith.constant 0 : index
    %c0_10 = arith.constant 0 : index
    %22 = vector.load %arg3[%c0_9, %c0_10] : memref<2x32xf32, #tpu.memory_space<vmem>>, vector<2x32xf32>
    %23 = vector.extract_strided_slice %22 {offsets = [0, 0], sizes = [1, 32], strides = [1, 1]} : vector<2x32xf32> to vector<1x32xf32>
    %24 = vector.shape_cast %23 : vector<1x32xf32> to vector<1x1x32xf32>
    %25 = vector.broadcast %24 : vector<1x1x32xf32> to vector<2x1x32xf32>
    %26 = arith.mulf %21, %25 : vector<2x1x32xf32>
    %cst_11 = arith.constant dense<0.000000e+00> : vector<2x1xf32>
    %27 = vector.multi_reduction <add>, %26, %cst_11 [2] : vector<2x1x32xf32> to vector<2x1xf32>
    %28 = vector.shape_cast %27 : vector<2x1xf32> to vector<2x1x1xf32>
    %29 = vector.extract_strided_slice %22 {offsets = [1, 0], sizes = [1, 32], strides = [1, 1]} : vector<2x32xf32> to vector<1x32xf32>
    %30 = vector.shape_cast %29 : vector<1x32xf32> to vector<1x1x32xf32>
    %31 = vector.broadcast %30 : vector<1x1x32xf32> to vector<2x1x32xf32>
    %32 = arith.mulf %21, %31 : vector<2x1x32xf32>
    %cst_12 = arith.constant dense<0.000000e+00> : vector<2x1xf32>
    %33 = vector.multi_reduction <add>, %32, %cst_12 [2] : vector<2x1x32xf32> to vector<2x1xf32>
    %34 = vector.shape_cast %33 : vector<2x1xf32> to vector<2x1x1xf32>
    %35 = tpu.concatenate %28, %34 in 2 : vector<2x1x1xf32>, vector<2x1x1xf32> -> vector<2x1x2xf32>
    %c0_13 = arith.constant 0 : index
    %c0_14 = arith.constant 0 : index
    %36 = vector.load %arg4[%c0_13, %c0_14] : memref<1x2xf32, #tpu.memory_space<vmem>>, vector<1x2xf32>
    %37 = vector.shape_cast %36 : vector<1x2xf32> to vector<1x1x2xf32>
    %38 = vector.broadcast %37 : vector<1x1x2xf32> to vector<2x1x2xf32>
    %39 = arith.addf %35, %38 : vector<2x1x2xf32>
    %cst_15 = arith.constant dense<0xFF800000> : vector<2x1xf32>
    %40 = vector.multi_reduction <maximumf>, %39, %cst_15 [2] : vector<2x1x2xf32> to vector<2x1xf32>
    %41 = vector.shape_cast %40 : vector<2x1xf32> to vector<2x1x1xf32>
    %42 = vector.broadcast %41 : vector<2x1x1xf32> to vector<2x1x2xf32>
    %43 = arith.subf %39, %42 : vector<2x1x2xf32>
    %44 = math.exp %43 : vector<2x1x2xf32>
    %cst_16 = arith.constant dense<0.000000e+00> : vector<2x1xf32>
    %45 = vector.multi_reduction <add>, %44, %cst_16 [2] : vector<2x1x2xf32> to vector<2x1xf32>
    %46 = vector.shape_cast %45 : vector<2x1xf32> to vector<2x1x1xf32>
    %47 = math.log %46 : vector<2x1x1xf32>
    %48 = vector.broadcast %47 : vector<2x1x1xf32> to vector<2x1x2xf32>
    %49 = arith.subf %43, %48 : vector<2x1x2xf32>
    %c0_17 = arith.constant 0 : index
    %c0_18 = arith.constant 0 : index
    %c0_19 = arith.constant 0 : index
    %50 = vector.load %arg5[%c0_17, %c0_18, %c0_19] : memref<2x1x2xf32, #tpu.memory_space<vmem>>, vector<2x1x2xf32>
    tpu.vector_store %arg5[%c0_17, %c0_18, %c0_19], %49 {strides = array<i32>} : memref<2x1x2xf32, #tpu.memory_space<vmem>>, vector<2x1x2xf32>,
    return
  }
  func.func @transform_0(%arg0: i32) -> (i32, i32, i32) {
    %c0_i32 = arith.constant 0 : i32
    %c0_i32_0 = arith.constant 0 : i32
    %c0_i32_1 = arith.constant 0 : i32
    return %arg0, %c0_i32, %c0_i32_0 : i32, i32, i32
  }
  func.func @transform_1(%arg0: i32) -> (i32, i32, i32) {
    %c0_i32 = arith.constant 0 : i32
    %c0_i32_0 = arith.constant 0 : i32
    %c0_i32_1 = arith.constant 0 : i32
    return %arg0, %c0_i32, %c0_i32_0 : i32, i32, i32
  }
  func.func @transform_2(%arg0: i32) -> (i32, i32) {
    %c0_i32 = arith.constant 0 : i32
    %c0_i32_0 = arith.constant 0 : i32
    %c0_i32_1 = arith.constant 0 : i32
    return %c0_i32, %c0_i32_0 : i32, i32
  }
  func.func @transform_3(%arg0: i32) -> (i32, i32) {
    %c0_i32 = arith.constant 0 : i32
    %c0_i32_0 = arith.constant 0 : i32
    %c0_i32_1 = arith.constant 0 : i32
    return %c0_i32, %c0_i32_0 : i32, i32
  }
  func.func @transform_4(%arg0: i32) -> (i32, i32, i32) {
    %c0_i32 = arith.constant 0 : i32
    %c0_i32_0 = arith.constant 0 : i32
    %c0_i32_1 = arith.constant 0 : i32
    return %arg0, %c0_i32, %c0_i32_0 : i32, i32, i32
  }
}

</mosaic_0001>

<llo_original>
// kernel: tpu_custom_call.1
$region0: #{tpu_custom_call.1}
  #allocation0 [shape = 'u32[]', space=smem, size = 0x4, offset = 0x4, fixed_abs, tag = 'smem constant byte address 0x4 - core index']
  #allocation1 [shape = 'u32[144,128]{1,0:T(1,128)}', space=vmem, size = 0x12000, scoped, tag = 'internal scratch']
  %s0 = inlined_call_operand.hbm [shape: f32[2,1,32], index: 0, kind: input, shape index: {}]
  %s1 = inlined_call_operand.hbm [shape: f32[2,8,32], index: 1, kind: input, shape index: {}]
  %s2 = inlined_call_operand.vmem [shape: f32[2,32], index: 2, kind: input, shape index: {}]
  %s3 = inlined_call_operand.vmem [shape: f32[1,2], index: 3, kind: input, shape index: {}]
  %s4 = inlined_call_operand.hbm [shape: f32[2,1,2], index: 4, kind: output, shape index: {}]
  %s5 = sld [smem:[#allocation0]]
  $region34: #{tpu_custom_call.1} parent=0
    _
  %s7 = ssub.s32 1, %s5
  %s8 = scalar_select 0, %s7, %s5
  $region1: #{tpu_custom_call.1} parent=0
    #allocation2 [shape = 'u8[1024]{0}', space=vmem, size = 0x400, scoped, tag = 'input window, operand 0, single buffered']
    #allocation3 [shape = 's32[1]{0}', space=sflag, size = 0x4, scoped, tag = 'scoped memory for tpu_custom_call.1']
    #allocation4 [shape = 's32[1]{0}', space=sflag, size = 0x4, scoped, tag = 'scoped memory for tpu_custom_call.1']
    #allocation5 [shape = 'u8[8192]{0}', space=vmem, size = 0x2000, scoped, tag = 'input window, operand 1, single buffered']
    #allocation6 [shape = 's32[1]{0}', space=sflag, size = 0x4, scoped, tag = 'scoped memory for tpu_custom_call.1']
    #allocation7 [shape = 'u8[1024]{0}', space=vmem, size = 0x400, scoped, tag = 'output window, operand 0, single buffered']
    %9 = vsyncpa [#allocation3], 0
    %10 = vsyncpa [#allocation6], 0
    %11 = vsyncpa [#allocation4], 0
    // Predicated region
    $region2: #{tpu_custom_call.1} parent=1 // pred_check
      _
    $region3: #{tpu_custom_call.1} parent=1 // pred_check_branch
      %13 = sbr.rel (0) target = $region5
    $region4: #{tpu_custom_call.1} parent=1 // pred_region
      %s15 = ssub.s32 32, 32
      %16 = vsyncadd [#allocation3], %s15
      %s17 = sshll.u32 [#allocation2], 4
      %s18 = int_to_ptr.vmem [resolvable:$true] %s17
      %23 = dma.hbm_to_vmem [thread:$0]  %s0, 32, %s18, [#allocation3], 16, 16, 1
    $region5: #{tpu_custom_call.1} parent=1 // pred_fallthru
      _
    // Predicated region
    $region6: #{tpu_custom_call.1} parent=1 // pred_check
      _
    $region7: #{tpu_custom_call.1} parent=1 // pred_check_branch
      %25 = sbr.rel (0) target = $region9
    $region8: #{tpu_custom_call.1} parent=1 // pred_region
      %s27 = ssub.s32 256, 256
      %28 = vsyncadd [#allocation6], %s27
      %s29 = sshll.u32 [#allocation5], 4
      %s30 = int_to_ptr.vmem [resolvable:$true] %s29
      %35 = dma.hbm_to_vmem [thread:$0]  %s1, 256, %s30, [#allocation6], 128, 128, 8
    $region9: #{tpu_custom_call.1} parent=1 // pred_fallthru
      _
    // Predicated region
    $region10: #{tpu_custom_call.1} parent=1 // pred_check
      _
    $region11: #{tpu_custom_call.1} parent=1 // pred_check_branch
      %37 = sbr.rel (0) target = $region13
    $region12: #{tpu_custom_call.1} parent=1 // pred_region
      _
    $region13: #{tpu_custom_call.1} parent=1 // pred_fallthru
      _
    // Predicated region
    $region14: #{tpu_custom_call.1} parent=1 // pred_check
      _
    $region15: #{tpu_custom_call.1} parent=1 // pred_check_branch
      %39 = sbr.rel (0) target = $region17
    $region16: #{tpu_custom_call.1} parent=1 // pred_region
      _
    $region17: #{tpu_custom_call.1} parent=1 // pred_fallthru
      _
    // Predicated region
    $region18: #{tpu_custom_call.1} parent=1 // pred_check
      _
    $region19: #{tpu_custom_call.1} parent=1 // pred_check_branch
      %41 = sbr.rel (0) target = $region21
    $region20: #{tpu_custom_call.1} parent=1 // pred_region
      %42 = dma.done [#allocation3], 32
    $region21: #{tpu_custom_call.1} parent=1 // pred_fallthru
      _
    // Predicated region
    $region22: #{tpu_custom_call.1} parent=1 // pred_check
      _
    $region23: #{tpu_custom_call.1} parent=1 // pred_check_branch
      %44 = sbr.rel (0) target = $region25
    $region24: #{tpu_custom_call.1} parent=1 // pred_region
      %45 = dma.done [#allocation6], 256
    $region25: #{tpu_custom_call.1} parent=1 // pred_fallthru
      _
    %v46 = vld [vmem:[#allocation2] sm:$0x1]
    %v47 = vld [vmem:[#allocation2 + $0x1] sm:$0x1]
    %v48 = vld [vmem:[#allocation5] sm:$0xff]
    %v49 = vld [vmem:[#allocation5 + $0x8] sm:$0xff]
    %v52 = vlaneseq
    %v53 = vshrl.u32 %v52, 7
    %v54 = vsub.s32 0, %v53
    %v55 = vrot.slane %v46, %v54
    %v56 = vlaneseq
    %v57 = vshrl.u32 %v56, 7
    %v58 = vsub.s32 0, %v57
    %v59 = vrot.slane %v47, %v58
    %v62 = vmul.f32 %v55, %v48
    %v63 = vmul.f32 %v59, %v49
    %vm64 = vcmask 261120
    %v65 = vsel %vm64, %v62, 0.0
    %66 = vadd.xlane.f32.xlu0 %v65
    %v67 = vpop.xlane.xlu0 %66
    %v68 = vsel %vm64, %v63, 0.0
    %69 = vadd.xlane.f32.xlu0 %v68
    %v70 = vpop.xlane.xlu0 %69
    %v71 = vmul.f32 %v67, 0.17677669
    %v72 = vmul.f32 %v70, 0.17677669
    %v73 = vrot.slane %v71, 4
    %v74 = vmax.f32 %v71, %v73
    %v75 = vrot.slane %v74, 2
    %v76 = vmax.f32 %v74, %v75
    %v77 = vrot.slane %v76, 1
    %v78 = vmax.f32 %v76, %v77
    %v79 = vrot.slane %v72, 4
    %v80 = vmax.f32 %v72, %v79
    %v81 = vrot.slane %v80, 2
    %v82 = vmax.f32 %v80, %v81
    %v83 = vrot.slane %v82, 1
    %v84 = vmax.f32 %v82, %v83
    %v85 = vsub.f32 %v71, %v78
    %v86 = vsub.f32 %v72, %v84
    %v87 = vmul.f32 %v85, 1.442695
    %v88 = vpow.pop %v87
    %v89 = vmul.f32 %v86, 1.442695
    %v90 = vpow.pop %v89
    %v91 = vrot.slane %v88, 4
    %v92 = vadd.f32 %v88, %v91
    %v93 = vrot.slane %v92, 2
    %v94 = vadd.f32 %v92, %v93
    %v95 = vrot.slane %v94, 1
    %v96 = vadd.f32 %v94, %v95
    %v97 = vrot.slane %v90, 4
    %v98 = vadd.f32 %v90, %v97
    %v99 = vrot.slane %v98, 2
    %v100 = vadd.f32 %v98, %v99
    %v101 = vrot.slane %v100, 1
    %v102 = vadd.f32 %v100, %v101
    %v103 = vrcp.pop %v96
    %v104 = vrcp.pop %v102
    %v105 = vmul.f32 %v88, %v103
    %v106 = vmul.f32 %v90, %v104
    %v107 = vmul.f32 %v105, %v48
    %v108 = vmul.f32 %v106, %v49
    %v109 = vsel %vm64, %v107, 0.0
    %v110 = vrot.slane %v109, 4
    %v111 = vadd.f32 %v109, %v110
    %v112 = vrot.slane %v111, 2
    %v113 = vadd.f32 %v111, %v112
    %v114 = vrot.slane %v113, 1
    %v115 = vadd.f32 %v113, %v114
    %v116 = vsel %vm64, %v108, 0.0
    %v117 = vrot.slane %v116, 4
    %v118 = vadd.f32 %v116, %v117
    %v119 = vrot.slane %v118, 2
    %v120 = vadd.f32 %v118, %v119
    %v121 = vrot.slane %v120, 1
    %v122 = vadd.f32 %v120, %v121
    %v123 = vld [vmem:[%s2] sm:$0x3]
    %v124 = vmul.f32 %v115, %v123
    %v125 = vmul.f32 %v122, %v123
    %vm126 = vcmask 253952
    %v127 = vsel %vm126, %v124, 0.0
    %128 = vadd.xlane.f32.xlu0 %v127
    %v129 = vpop.xlane.xlu0 %128
    %v130 = vsel %vm126, %v125, 0.0
    %131 = vadd.xlane.f32.xlu0 %v130
    %v132 = vpop.xlane.xlu0 %131
    %vm133 = vcmask 254977
    %v134 = vsel %vm133, %v124, 0.0
    %135 = vadd.xlane.f32.xlu0 %v134
    %v136 = vpop.xlane.xlu0 %135
    %v137 = vsel %vm133, %v125, 0.0
    %138 = vadd.xlane.f32.xlu0 %v137
    %v139 = vpop.xlane.xlu0 %138
    %v142 = vrot.slane %v136, 1
    %v143 = vrot.slane %v139, 1
    %vm146 = vcmask 7168
    %v147 = vsel %vm146, %v129, %v142
    %v148 = vsel %vm146, %v132, %v143
    %v149 = vld [vmem:[%s3] sm:$0x1]
    %v150 = vadd.f32 %v147, %v149
    %v151 = vadd.f32 %v148, %v149
    %vm152 = vcmask 8192
    %v153 = vsel %vm152, %v150, -inf
    %154 = vmax.xlane.f32.xlu0 %v153
    %v155 = vpop.xlane.xlu0 %154
    %v156 = vsel %vm152, %v151, -inf
    %157 = vmax.xlane.f32.xlu0 %v156
    %v158 = vpop.xlane.xlu0 %157
    %v159 = vsub.f32 %v150, %v155
    %v160 = vsub.f32 %v151, %v158
    %v161 = vmul.f32 %v159, 1.442695
    %v162 = vpow.pop %v161
    %v163 = vmul.f32 %v160, 1.442695
    %v164 = vpow.pop %v163
    %v165 = vsel %vm152, %v162, 0.0
    %166 = vadd.xlane.f32.xlu0 %v165
    %v167 = vpop.xlane.xlu0 %166
    %v168 = vsel %vm152, %v164, 0.0
    %169 = vadd.xlane.f32.xlu0 %v168
    %v170 = vpop.xlane.xlu0 %169
    %v171 = vlog2.pop %v167
    %v172 = vmul.f32 %v171, 0.6931472
    %v173 = vlog2.pop %v170
    %v174 = vmul.f32 %v173, 0.6931472
    %v175 = vsub.f32 %v159, %v172
    %v176 = vsub.f32 %v160, %v174
    %177 = vst.msk [vmem:[#allocation7] sm:$0x1] %vm152, %v175
    %178 = vst.msk [vmem:[#allocation7 + $0x1] sm:$0x1] %vm152, %v176
    // Predicated region
    $region26: #{tpu_custom_call.1} parent=1 // pred_check
      _
    $region27: #{tpu_custom_call.1} parent=1 // pred_check_branch
      %180 = sbr.rel (0) target = $region29
    $region28: #{tpu_custom_call.1} parent=1 // pred_region
      %s182 = ssub.s32 32, 32
      %183 = vsyncadd [#allocation4], %s182
      %s184 = sshll.u32 [#allocation7], 4
      %s185 = int_to_ptr.vmem [resolvable:$true] %s184
      %190 = dma.vmem_to_hbm [thread:$0]  %s185, 32, %s4, [#allocation4], 16, 16, 1
    $region29: #{tpu_custom_call.1} parent=1 // pred_fallthru
      _
    // Predicated region
    $region30: #{tpu_custom_call.1} parent=1 // pred_check
      _
    $region31: #{tpu_custom_call.1} parent=1 // pred_check_branch
      %192 = sbr.rel (0) target = $region33
    $region32: #{tpu_custom_call.1} parent=1 // pred_region
      %193 = dma.done [#allocation4], 32
    $region33: #{tpu_custom_call.1} parent=1 // pred_fallthru
      _
    %194 = vsyncpa [#allocation3], 1
    %195 = vsyncpa [#allocation6], 1
    %196 = vsyncpa [#allocation4], 1

</llo_original>
